<compile_context>
chip_gen: v5e
topology: v5e:2x2
jax: 0.10.0
libtpu: 0.0.40
codegen_flags: <defaults>
</compile_context>

<pallas_src>
import functools

import jax
import jax.numpy as jnp
from jax.experimental import pallas as pl
from jax.experimental.pallas import tpu as pltpu

LANE = 128          # hidden/output feature axes padded to multiples of the 128-lane vreg
SUBLANE_BF16 = 16   # bf16 sublane packing: batch tiles are multiples of this


def _round_up(n, m):
    return (n + m - 1) // m * m


def _cdiv(a, b):
    return -(-a // b)


def _apply_act(name, x):
    if name == "relu":
        return jnp.maximum(x, 0.0)
    if name == "tanh":
        return jnp.tanh(x)
    if name == "identity":
        return x
    raise ValueError(f"unsupported activation: {name}")


def _vmem_capacity_bytes():
    """Physical per-core VMEM (hardware query with a conservative v7x fallback)."""
    try:
        return int(pltpu.get_tpu_info().vmem_capacity_bytes)
    except Exception:
        return 64 << 20


@functools.lru_cache(maxsize=None)
def _single_buffer_supported():
    """Feature-detect ONCE whether pipeline_mode=pl.Buffered(1) is honored.

    Done with a tiny probe compile so the real MLP build needs no broad
    try/except that could mask genuine lowering / VMEM errors.
    """
    if not hasattr(pl, "Buffered"):
        return False

    def _probe_kernel(w_ref, o_ref):
        o_ref[...] = w_ref[...] * 2.0

    try:
        probe = pl.pallas_call(
            _probe_kernel,
            out_shape=jax.ShapeDtypeStruct((16, LANE), jnp.float32),
            grid_spec=pltpu.PrefetchScalarGridSpec(
                num_scalar_prefetch=0,
                grid=(2,),
                in_specs=[pl.BlockSpec((8, LANE), lambda i: (0, 0),
                                       pipeline_mode=pl.Buffered(1))],
                out_specs=pl.BlockSpec((8, LANE), lambda i: (i, 0)),
            ),
        )
        jax.block_until_ready(probe(jnp.ones((8, LANE), jnp.float32)))
        return True
    except Exception:   # probe-only; real build never swallows exceptions
        return False


def mlp_kernel(x_ref, *refs, activations, compute_dtype):
    """Fused MLP: all linear layers + activations computed in VMEM.

    refs = (w0, b0, w1, b1, ..., w_out, b_out, out_ref)
    Weights are (in_i, out_i_pad) in compute_dtype (bf16); biases are (1, out_i_pad)
    f32 rows broadcast over the batch. MXU runs bf16 x bf16 -> f32 accumulate; bias
    add + activations stay f32 (VPU/EUP); h is cast back to bf16 once per layer.
    """
    out_ref = refs[-1]
    param_refs = refs[:-1]
    n_layers = len(param_refs) // 2

    h = x_ref[...]                                       # bf16 (batch_tile, in_size)
    for layer in range(n_layers):
        w = param_refs[2 * layer][...]                   # bf16 (in_pad, out_pad)
        b = param_refs[2 * layer + 1][...]               # f32  (1, out_pad)
        acc = jnp.dot(h, w, preferred_element_type=jnp.float32) + b
        if layer < n_layers - 1:
            h = _apply_act(activations[layer], acc).astype(compute_dtype)
        else:
            out_ref[...] = acc.astype(out_ref.dtype)


def prepare_params(weights, biases, *, compute_dtype=jnp.bfloat16):
    """Pad + cast model parameters ONCE (hoisted out of the per-call forward path).

    weights: list of (in_i, out_i) arrays (x @ W layout, i.e. PyTorch weight transposed)
    biases:  list of (out_i,) arrays
    """
    n_layers = len(weights)
    if len(biases) != n_layers:
        raise ValueError("len(biases) must equal len(weights)")
    dims = [weights[0].shape[0]] + [w.shape[1] for w in weights]
    # Layer 0's contraction dim stays un-padded (x is not lane-padded in HBM);
    # every later contraction dim and every output dim is padded to 128 lanes.
    in_dims = [dims[0]] + [_round_up(d, LANE) for d in dims[1:-1]]
    out_dims = [_round_up(d, LANE) for d in dims[1:]]

    params = []
    for li, (w, b) in enumerate(zip(weights, biases)):
        ip, op = in_dims[li], out_dims[li]
        w_p = jnp.zeros((ip, op), jnp.float32).at[:w.shape[0], :w.shape[1]].set(w)
        b_p = jnp.zeros((1, op), jnp.float32).at[0, :b.shape[0]].set(b)
        params.append(w_p.astype(compute_dtype))        # bf16 weights
        params.append(b_p)                               # f32 biases
    return dict(params=params, dims=dims, in_dims=in_dims, out_dims=out_dims,
                compute_dtype=compute_dtype)


def mlp_forward(x, prepared, activations, *, batch_tile=None, out_dtype=jnp.float32):
    """Run the fused MLP Pallas kernel.

    x:          (B, input_size) float array
    prepared:   output of prepare_params()  (padding/casting done once per model)
    activations: list of activation names, one per non-final layer
    """
    params = prepared["params"]
    in_dims = prepared["in_dims"]
    out_dims = prepared["out_dims"]
    compute_dtype = prepared["compute_dtype"]
    n_layers = len(in_dims)
    if len(activations) != n_layers - 1:
        raise ValueError("need exactly one activation per non-final layer")

    B, in_size = x.shape
    if in_size != in_dims[0]:
        raise ValueError("x feature dim does not match prepared params")
    out_size = prepared["dims"][-1]
    out_pad = out_dims[-1]
    out_itemsize = jnp.dtype(out_dtype).itemsize

    w_bytes = sum(int(p.size) * p.dtype.itemsize for p in params[0::2])
    b_bytes = sum(int(p.size) * p.dtype.itemsize for p in params[1::2])
    widest = max([in_size] + out_dims)

    # --- batch tiling: large tiles for HBM roofline; >=2 tiles for v7x megacore ----
    if batch_tile is None:
        batch_tile = 512
    batch_tile = _round_up(min(batch_tile, _round_up(B, SUBLANE_BF16)), SUBLANE_BF16)
    if B > 2 * SUBLANE_BF16 and _cdiv(B, batch_tile) < 2:
        batch_tile = _round_up(_cdiv(B, 2), SUBLANE_BF16)

    use_single = _single_buffer_supported()
    w_factor = 1 if use_single else 2     # single-buffered params counted once

    def footprint(bt):
        x_tile = bt * in_size * jnp.dtype(compute_dtype).itemsize
        o_tile = bt * out_pad * out_itemsize
        inter = bt * widest * (4 + 4 + 2)        # f32 acc + f32 temp + bf16 h
        return w_factor * (w_bytes + b_bytes) + 2 * (x_tile + o_tile) + inter

    vmem_budget = _vmem_capacity_bytes() * 85 // 100   # ~15% headroom below physical
    while footprint(batch_tile) > vmem_budget and batch_tile > SUBLANE_BF16:
        batch_tile = max(SUBLANE_BF16, _round_up(batch_tile // 2, SUBLANE_BF16))
    # TODO(synk): if footprint(SUBLANE_BF16) still exceeds vmem_budget the weights
    # themselves don't fit resident VMEM (v7x first) -> needs a streamed K/N-tiled
    # path via pltpu.emit_pipeline with Buffered(2-3) on the streamed weight.

    B_pad = _round_up(B, batch_tile)
    n_tiles = B_pad // batch_tile

    # Cast once to bf16; pad only the batch dim (feature dim keeps the true in_size).
    x_c = x.astype(compute_dtype)
    if B_pad != B:
        x_c = jnp.pad(x_c, ((0, B_pad - B), (0, 0)))

    x_spec = pl.BlockSpec((batch_tile, in_size), lambda i: (i, 0))
    o_spec = pl.BlockSpec((batch_tile, out_pad), lambda i: (i, 0))

    param_specs = []
    for li in range(n_layers):
        ip, op = in_dims[li], out_dims[li]
        kw = {"pipeline_mode": pl.Buffered(1)} if use_single else {}
        # constant index_map -> parameters stay resident across all grid steps
        param_specs.append(pl.BlockSpec((ip, op), lambda i: (0, 0), **kw))
        param_specs.append(pl.BlockSpec((1, op), lambda i: (0, 0), **kw))

    kernel = functools.partial(mlp_kernel, activations=tuple(activations),
                               compute_dtype=compute_dtype)

    flops = 2 * B_pad * sum(in_dims[i] * out_dims[i] for i in range(n_layers))
    transc = B_pad * sum(out_dims[i] for i, a in enumerate(activations) if a == "tanh")
    bytes_accessed = (B_pad * in_size * jnp.dtype(compute_dtype).itemsize
                      + w_bytes + b_bytes + B_pad * out_pad * out_itemsize)
    cost = pl.CostEstimate(flops=flops, transcendentals=transc,
                           bytes_accessed=bytes_accessed)

    vmem_limit = int(min(vmem_budget,
                         max(footprint(batch_tile) * 3 // 2 + (2 << 20), 16 << 20)))

    y_pad = pl.pallas_call(
        kernel,
        out_shape=jax.ShapeDtypeStruct((B_pad, out_pad), out_dtype),
        grid_spec=pltpu.PrefetchScalarGridSpec(
            num_scalar_prefetch=0,
            grid=(n_tiles,),
            in_specs=[x_spec] + param_specs,
            out_specs=o_spec,
        ),
        compiler_params=pltpu.CompilerParams(
            dimension_semantics=("parallel",),
            vmem_limit_bytes=vmem_limit,
        ),
        cost_estimate=cost,
    )(x_c, *params)

    return y_pad[:B, :out_size]


def init_linear(key, in_features, out_features):
    """Deterministic init matching nn.Linear shapes (weight: (out, in), bias: (out,))."""
    kw, kb = jax.random.split(key)
    bound = 1.0 / jnp.sqrt(in_features)
    w = jax.random.uniform(kw, (out_features, in_features), jnp.float32, -bound, bound)
    b = jax.random.uniform(kb, (out_features,), jnp.float32, -bound, bound)
    return w, b


def reference_mlp(x, weights, biases, activations, compute_dtype=jnp.bfloat16):
    """Pure-JAX reference with the same bf16-operand / f32-accumulate numerics."""
    h = x.astype(compute_dtype)
    n = len(weights)
    out = None
    for i, (w, b) in enumerate(zip(weights, biases)):
        acc = jnp.dot(h, w.astype(compute_dtype),
                      preferred_element_type=jnp.float32) + b.astype(jnp.float32)
        if i < n - 1:
            h = _apply_act(activations[i], acc).astype(compute_dtype)
        else:
            out = acc
    return out


if __name__ == "__main__":
    # Module config (small, consistent with the forward pass):
    input_size = 16
    hidden_sizes = [32, 32]
    output_size = 8
    activations = ["relu", "tanh"]   # act after input_layer and after hidden_layers[0]
    batch = 300                      # ragged: exercises batch padding + >=2 grid tiles

    key = jax.random.PRNGKey(0)
    k_x, k0, k1, k2 = jax.random.split(key, 4)

    x = jax.random.normal(k_x, (batch, input_size), jnp.float32)

    # input_layer: Linear(input_size -> hidden_sizes[0])
    w_in, b_in = init_linear(k0, input_size, hidden_sizes[0])
    # hidden_layers[0]: Linear(hidden_sizes[0] -> hidden_sizes[1])
    w_h, b_h = init_linear(k1, hidden_sizes[0], hidden_sizes[1])
    # output_layer: Linear(hidden_sizes[-1] -> output_size)
    w_out, b_out = init_linear(k2, hidden_sizes[1], output_size)

    # Transpose PyTorch (out, in) -> (in, out) for x @ W layout.
    weights = [w_in.T, w_h.T, w_out.T]
    biases = [b_in, b_h, b_out]

    prepared = prepare_params(weights, biases)       # once per model, not per call
    y = mlp_forward(x, prepared, activations)
    y = jax.block_until_ready(y)

    # Reference with matching bf16 MXU-operand / f32-accumulate numerics.
    y_ref = reference_mlp(x, weights, biases, activations)
    assert y.shape == (batch, output_size)
    assert jnp.allclose(y, y_ref, atol=1e-2, rtol=1e-2), \
        float(jnp.max(jnp.abs(y - y_ref)))

    print("KERNEL_OK")
</pallas_src>

<mosaic_0001>
module attributes {stable_mosaic.version = 11 : i64} {
  func.func @_probe_kernel(%arg0: i32, %arg1: memref<8x128xf32, #tpu.memory_space<vmem>>, %arg2: memref<8x128xf32, #tpu.memory_space<vmem>>) attributes {dimension_semantics = [#tpu.dimension_semantics<arbitrary>], iteration_bounds = array<i64: 2>, scalar_prefetch = 0 : i64, scratch_operands = 0 : i64, tpu.core_type = #tpu.core_type<tc>, window_params = [{pipeline_mode = #tpu.pipeline_mode<synchronous>, transform_indices = @transform_0, window_bounds = array<i64: 8, 128>}, {transform_indices = @transform_1, window_bounds = array<i64: 8, 128>}]} {
    %c0 = arith.constant 0 : index
    %c0_0 = arith.constant 0 : index
    %0 = vector.load %arg1[%c0, %c0_0] : memref<8x128xf32, #tpu.memory_space<vmem>>, vector<8x128xf32>
    %cst = arith.constant 2.000000e+00 : f32
    %1 = vector.broadcast %cst : f32 to vector<8x128xf32>
    %2 = arith.mulf %0, %1 : vector<8x128xf32>
    %c0_1 = arith.constant 0 : index
    %c0_2 = arith.constant 0 : index
    %3 = vector.load %arg2[%c0_1, %c0_2] : memref<8x128xf32, #tpu.memory_space<vmem>>, vector<8x128xf32>
    tpu.vector_store %arg2[%c0_1, %c0_2], %2 {strides = array<i32>} : memref<8x128xf32, #tpu.memory_space<vmem>>, vector<8x128xf32>,
    return
  }
  func.func @transform_0(%arg0: i32) -> (i32, i32) {
    %c0_i32 = arith.constant 0 : i32
    %c0_i32_0 = arith.constant 0 : i32
    %c0_i32_1 = arith.constant 0 : i32
    return %c0_i32, %c0_i32_0 : i32, i32
  }
  func.func @transform_1(%arg0: i32) -> (i32, i32) {
    %c0_i32 = arith.constant 0 : i32
    %c0_i32_0 = arith.constant 0 : i32
    return %arg0, %c0_i32 : i32, i32
  }
}

module attributes {stable_mosaic.version = 11 : i64} {
  func.func @mlp_kernel(%arg0: i32, %arg1: memref<160x16xbf16, #tpu.memory_space<vmem>>, %arg2: memref<16x128xbf16, #tpu.memory_space<vmem>>, %arg3: memref<1x128xf32, #tpu.memory_space<vmem>>, %arg4: memref<128x128xbf16, #tpu.memory_space<vmem>>, %arg5: memref<1x128xf32, #tpu.memory_space<vmem>>, %arg6: memref<128x128xbf16, #tpu.memory_space<vmem>>, %arg7: memref<1x128xf32, #tpu.memory_space<vmem>>, %arg8: memref<160x128xf32, #tpu.memory_space<vmem>>) attributes {dimension_semantics = [#tpu.dimension_semantics<parallel>], iteration_bounds = array<i64: 2>, scalar_prefetch = 0 : i64, scratch_operands = 0 : i64, tpu.core_type = #tpu.core_type<tc>, window_params = [{transform_indices = @transform_0, window_bounds = array<i64: 160, 16>}, {pipeline_mode = #tpu.pipeline_mode<synchronous>, transform_indices = @transform_1, window_bounds = array<i64: 16, 128>}, {pipeline_mode = #tpu.pipeline_mode<synchronous>, transform_indices = @transform_2, window_bounds = array<i64: 1, 128>}, {pipeline_mode = #tpu.pipeline_mode<synchronous>, transform_indices = @transform_3, window_bounds = array<i64: 128, 128>}, {pipeline_mode = #tpu.pipeline_mode<synchronous>, transform_indices = @transform_4, window_bounds = array<i64: 1, 128>}, {pipeline_mode = #tpu.pipeline_mode<synchronous>, transform_indices = @transform_5, window_bounds = array<i64: 128, 128>}, {pipeline_mode = #tpu.pipeline_mode<synchronous>, transform_indices = @transform_6, window_bounds = array<i64: 1, 128>}, {transform_indices = @transform_7, window_bounds = array<i64: 160, 128>}]} {
    %c0 = arith.constant 0 : index
    %c0_0 = arith.constant 0 : index
    %0 = vector.load %arg1[%c0, %c0_0] : memref<160x16xbf16, #tpu.memory_space<vmem>>, vector<160x16xbf16>
    %c0_1 = arith.constant 0 : index
    %c0_2 = arith.constant 0 : index
    %1 = vector.load %arg2[%c0_1, %c0_2] : memref<16x128xbf16, #tpu.memory_space<vmem>>, vector<16x128xbf16>
    %c0_3 = arith.constant 0 : index
    %c0_4 = arith.constant 0 : index
    %2 = vector.load %arg3[%c0_3, %c0_4] : memref<1x128xf32, #tpu.memory_space<vmem>>, vector<1x128xf32>
    %cst = arith.constant dense<0.000000e+00> : vector<160x128xf32>
    %3 = tpu.matmul %0, %1, %cst {dimension_numbers = #tpu.dot_dimension_numbers<[1], [0], [0], [1], [0, 0, 1, 1], [], []>} : vector<160x16xbf16>, vector<16x128xbf16>, vector<160x128xf32> -> vector<160x128xf32>
    %4 = vector.broadcast %2 : vector<1x128xf32> to vector<160x128xf32>
    %5 = arith.addf %3, %4 : vector<160x128xf32>
    %cst_5 = arith.constant 0.000000e+00 : f32
    %6 = vector.broadcast %cst_5 : f32 to vector<160x128xf32>
    %7 = arith.maximumf %5, %6 : vector<160x128xf32>
    %8 = arith.truncf %7 : vector<160x128xf32> to vector<160x128xbf16>
    %c0_6 = arith.constant 0 : index
    %c0_7 = arith.constant 0 : index
    %9 = vector.load %arg4[%c0_6, %c0_7] : memref<128x128xbf16, #tpu.memory_space<vmem>>, vector<128x128xbf16>
    %c0_8 = arith.constant 0 : index
    %c0_9 = arith.constant 0 : index
    %10 = vector.load %arg5[%c0_8, %c0_9] : memref<1x128xf32, #tpu.memory_space<vmem>>, vector<1x128xf32>
    %cst_10 = arith.constant dense<0.000000e+00> : vector<160x128xf32>
    %11 = tpu.matmul %8, %9, %cst_10 {dimension_numbers = #tpu.dot_dimension_numbers<[1], [0], [0], [1], [0, 0, 1, 1], [], []>} : vector<160x128xbf16>, vector<128x128xbf16>, vector<160x128xf32> -> vector<160x128xf32>
    %12 = vector.broadcast %10 : vector<1x128xf32> to vector<160x128xf32>
    %13 = arith.addf %11, %12 : vector<160x128xf32>
    %14 = math.tanh %13 : vector<160x128xf32>
    %15 = arith.truncf %14 : vector<160x128xf32> to vector<160x128xbf16>
    %c0_11 = arith.constant 0 : index
    %c0_12 = arith.constant 0 : index
    %16 = vector.load %arg6[%c0_11, %c0_12] : memref<128x128xbf16, #tpu.memory_space<vmem>>, vector<128x128xbf16>
    %c0_13 = arith.constant 0 : index
    %c0_14 = arith.constant 0 : index
    %17 = vector.load %arg7[%c0_13, %c0_14] : memref<1x128xf32, #tpu.memory_space<vmem>>, vector<1x128xf32>
    %cst_15 = arith.constant dense<0.000000e+00> : vector<160x128xf32>
    %18 = tpu.matmul %15, %16, %cst_15 {dimension_numbers = #tpu.dot_dimension_numbers<[1], [0], [0], [1], [0, 0, 1, 1], [], []>} : vector<160x128xbf16>, vector<128x128xbf16>, vector<160x128xf32> -> vector<160x128xf32>
    %19 = vector.broadcast %17 : vector<1x128xf32> to vector<160x128xf32>
    %20 = arith.addf %18, %19 : vector<160x128xf32>
    %c0_16 = arith.constant 0 : index
    %c0_17 = arith.constant 0 : index
    %21 = vector.load %arg8[%c0_16, %c0_17] : memref<160x128xf32, #tpu.memory_space<vmem>>, vector<160x128xf32>
    tpu.vector_store %arg8[%c0_16, %c0_17], %20 {strides = array<i32>} : memref<160x128xf32, #tpu.memory_space<vmem>>, vector<160x128xf32>,
    return
  }
  func.func @transform_0(%arg0: i32) -> (i32, i32) {
    %c0_i32 = arith.constant 0 : i32
    %c0_i32_0 = arith.constant 0 : i32
    return %arg0, %c0_i32 : i32, i32
  }
  func.func @transform_1(%arg0: i32) -> (i32, i32) {
    %c0_i32 = arith.constant 0 : i32
    %c0_i32_0 = arith.constant 0 : i32
    %c0_i32_1 = arith.constant 0 : i32
    return %c0_i32, %c0_i32_0 : i32, i32
  }
  func.func @transform_2(%arg0: i32) -> (i32, i32) {
    %c0_i32 = arith.constant 0 : i32
    %c0_i32_0 = arith.constant 0 : i32
    %c0_i32_1 = arith.constant 0 : i32
    return %c0_i32, %c0_i32_0 : i32, i32
  }
  func.func @transform_3(%arg0: i32) -> (i32, i32) {
    %c0_i32 = arith.constant 0 : i32
    %c0_i32_0 = arith.constant 0 : i32
    %c0_i32_1 = arith.constant 0 : i32
    return %c0_i32, %c0_i32_0 : i32, i32
  }
  func.func @transform_4(%arg0: i32) -> (i32, i32) {
    %c0_i32 = arith.constant 0 : i32
    %c0_i32_0 = arith.constant 0 : i32
    %c0_i32_1 = arith.constant 0 : i32
    return %c0_i32, %c0_i32_0 : i32, i32
  }
  func.func @transform_5(%arg0: i32) -> (i32, i32) {
    %c0_i32 = arith.constant 0 : i32
    %c0_i32_0 = arith.constant 0 : i32
    %c0_i32_1 = arith.constant 0 : i32
    return %c0_i32, %c0_i32_0 : i32, i32
  }
  func.func @transform_6(%arg0: i32) -> (i32, i32) {
    %c0_i32 = arith.constant 0 : i32
    %c0_i32_0 = arith.constant 0 : i32
    %c0_i32_1 = arith.constant 0 : i32
    return %c0_i32, %c0_i32_0 : i32, i32
  }
  func.func @transform_7(%arg0: i32) -> (i32, i32) {
    %c0_i32 = arith.constant 0 : i32
    %c0_i32_0 = arith.constant 0 : i32
    return %arg0, %c0_i32 : i32, i32
  }
}

</mosaic_0001>

<llo_original>
// kernel: tpu_custom_call.1
$region0: #{tpu_custom_call.1}
  #allocation0 [shape = 'u32[]', space=smem, size = 0x4, offset = 0x4, fixed_abs, tag = 'smem constant byte address 0x4 - core index']
  #allocation1 [shape = 'u32[72,128]{1,0:T(1,128)}', space=vmem, size = 0x9000, scoped, tag = 'internal scratch']
  %s0 = inlined_call_operand.hbm [shape: f32[8,128], index: 0, kind: input, shape index: {}]
  %s1 = inlined_call_operand.hbm [shape: f32[16,128], index: 1, kind: output, shape index: {}]
  %s2 = sld [smem:[#allocation0]]
  $region41: #{tpu_custom_call.1} parent=0
    _
  %s4 = ssub.s32 1, %s2
  %s5 = scalar_select 0, %s4, %s2
  $region1: #{tpu_custom_call.1} parent=0
    #allocation2 [shape = 'u8[4096]{0}', space=vmem, size = 0x1000, scoped, tag = 'input window, operand 0, single buffered']
    #allocation3 [shape = 's32[2]{0}', space=sflag, size = 0x8, scoped, tag = 'scoped memory for tpu_custom_call.1']
    #allocation4 [shape = 's32[2]{0}', space=sflag, size = 0x8, scoped, tag = 'scoped memory for tpu_custom_call.1']
    #allocation5 [shape = 'u8[8192]{0}', space=vmem, size = 0x2000, scoped, tag = 'output window, operand 0']
    %6 = vsyncpa [#allocation3], 0
    %7 = vsyncpa [#allocation4], 0
    %s8 = scalar_lea.sflag [#allocation4], 1
    %9 = vsyncpa %s8, 0
    loop: start=0, step=1, limit=4
    $region2: #{tpu_custom_call.1} parent=1 // loop_pre_header
      _
    $region3: #{tpu_custom_call.1} parent=1 // loop_header
      %s11 = sphi 0, %s15
      %p12 = scmp.ge.s32.totalorder %s11, 4
      %s19 = sphi 0, %s19
      %s21 = sphi 0, %s19
      %s22 = sphi 0, %s21
      %s36 = sphi 0, %s22
      %s42 = sphi 0, %s44
      %s45 = sphi 0, %s42
      %s46 = sphi 0, %s45
      %s62 = sphi 0, %s46
    $region4: #{tpu_custom_call.1} parent=1 // loop_header_branch
      %14 = sbr.rel (%p12) target = $region8
    $region5: #{tpu_custom_call.1} parent=1 // loop_body
      %s16 = ssub.s32 %s11, 1
      %s17 = ssub.s32 %s11, 2
      %s18 = sadd.s32 %s11, 1
      %s20 = sadd.s32 %s19, 1
      %p23 = scmp.eq.s32.totalorder %s11, 1
      %p24 = scmp.ne.s32.totalorder %s19, %s21
      %p25 = scmp.eq.s32.totalorder %s11, 0
      %p26 = por %p24, %p25
      %p27 = scmp.ne.s32.totalorder %s19, %s21
      %p28 = scmp.eq.s32.totalorder %s16, 1
      %p29 = por %p27, %p28
      %p30 = scmp.ne.s32.totalorder %s21, %s22
      %p31 = scmp.eq.s32.totalorder %s16, 0
      %p32 = por %p30, %p31
      %p33 = scmp.ne.s32.totalorder %s21, %s22
      %p34 = scmp.eq.s32.totalorder %s17, 1
      %p35 = por %p33, %p34
      %p37 = scmp.ne.s32.totalorder %s22, %s36
      %p38 = scmp.eq.s32.totalorder %s17, 0
      %p39 = por %p37, %p38
      %s40 = ssub.s32 %s11, %s18
      %p41 = scmp.eq.s32.totalorder %s40, 0
      %s43 = sadd.s32 %s42, 1
      %s44 = scalar_select %p41, %s42, %s43
      %p47 = pneg %p41
      %p48 = scmp.eq.s32.totalorder %s11, 1
      %p49 = por %p47, %p48
      %p50 = scmp.ne.s32.totalorder %s42, %s45
      %p51 = scmp.eq.s32.totalorder %s11, 0
      %p52 = por %p50, %p51
      %p53 = scmp.ne.s32.totalorder %s42, %s45
      %p54 = scmp.eq.s32.totalorder %s16, 1
      %p55 = por %p53, %p54
      %p56 = scmp.ne.s32.totalorder %s45, %s46
      %p57 = scmp.eq.s32.totalorder %s16, 0
      %p58 = por %p56, %p57
      %p59 = scmp.ne.s32.totalorder %s45, %s46
      %p60 = scmp.eq.s32.totalorder %s17, 1
      %p61 = por %p59, %p60
      %p63 = scmp.ne.s32.totalorder %s46, %s62
      %p64 = scmp.eq.s32.totalorder %s17, 0
      %p65 = por %p63, %p64
      %p66 = scmp.le.s32.totalorder 1, %s11
      %p67 = scmp.lt.s32.totalorder %s11, 3
      %p68 = pnand %p66, %p67
      %p69 = pneg %p68
      // Predicated region
      $region9: #{tpu_custom_call.1} parent=5 // pred_check
        _
      $region10: #{tpu_custom_call.1} parent=5 // pred_check_branch
        %71 = sbr.rel (%p68) target = $region12
      $region11: #{tpu_custom_call.1} parent=5 // pred_region
        %s72 = ssub.s32 %s11, 1
        // Predicated region
        $region13: #{tpu_custom_call.1} parent=11 // pred_check
          %p73 = pneg %p32
        $region14: #{tpu_custom_call.1} parent=11 // pred_check_branch
          %75 = sbr.rel (%p73) target = $region16
        $region15: #{tpu_custom_call.1} parent=11 // pred_region
          %77 = vsyncadd [#allocation3], 0
          %s79 = sshll.u32 %s0, 4
          %s80 = int_to_ptr.hbm [resolvable:$true] %s79
          %s81 = sshll.u32 [#allocation2], 4
          %s82 = int_to_ptr.vmem [resolvable:$true] %s81
          %84 = dma.hbm_to_vmem [thread:$0]  %s80, 128, %s82, [#allocation3]
        $region16: #{tpu_custom_call.1} parent=11 // pred_fallthru
          _
      $region12: #{tpu_custom_call.1} parent=5 // pred_fallthru
        _
      %p85 = scmp.lt.s32.totalorder %s11, 2
      // Predicated region
      $region17: #{tpu_custom_call.1} parent=5 // pred_check
        %p86 = pneg %p85
      $region18: #{tpu_custom_call.1} parent=5 // pred_check_branch
        %88 = sbr.rel (%p86) target = $region20
      $region19: #{tpu_custom_call.1} parent=5 // pred_region
        _
      $region20: #{tpu_custom_call.1} parent=5 // pred_fallthru
        _
      %p89 = scmp.le.s32.totalorder 1, %s11
      %p90 = scmp.lt.s32.totalorder %s11, 3
      %p91 = pnand %p89, %p90
      %p92 = pneg %p91
      // Predicated region
      $region21: #{tpu_custom_call.1} parent=5 // pred_check
        _
      $region22: #{tpu_custom_call.1} parent=5 // pred_check_branch
        %94 = sbr.rel (%p91) target = $region24
      $region23: #{tpu_custom_call.1} parent=5 // pred_region
        %s95 = ssub.s32 %s11, 1
        // Predicated region
        $region25: #{tpu_custom_call.1} parent=23 // pred_check
          %p96 = pneg %p32
        $region26: #{tpu_custom_call.1} parent=23 // pred_check_branch
          %98 = sbr.rel (%p96) target = $region28
        $region27: #{tpu_custom_call.1} parent=23 // pred_region
          %100 = dma.done [#allocation3], 128
        $region28: #{tpu_custom_call.1} parent=23 // pred_fallthru
          _
        %p101 = pneg %p32
        %p102 = pneg %p29
        %p103 = pneg %p58
        %p104 = pneg %p55
        %s105 = sand.u32 %s45, 1
        %s106 = scalar_lea.sflag [#allocation4], %s105
        %s107 = sand.u32 %s45, 1
        %s108 = smul.addr %s107, 8
        %s109 = scalar_lea.vmem [#allocation5], %s108
        %v110 = vld [vmem:[#allocation2] sm:$0xff]
        %v111 = vmul.f32 %v110, 2.0
        %112 = vst [vmem:[%s109] sm:$0xff] %v111
        %s113 = sand.u32 %s45, 1
        %s114 = scalar_lea.sflag [#allocation4], %s113
        %s115 = sand.u32 %s45, 1
        %s116 = smul.addr %s115, 8
        %s117 = scalar_lea.vmem [#allocation5], %s116
        // Predicated region
        $region29: #{tpu_custom_call.1} parent=23 // pred_check
          %p118 = pneg %p55
        $region30: #{tpu_custom_call.1} parent=23 // pred_check_branch
          %120 = sbr.rel (%p118) target = $region32
        $region31: #{tpu_custom_call.1} parent=23 // pred_region
          %122 = vsyncadd %s114, 0
          %s123 = smul.addr %s16, 8
          %s124 = scalar_lea.hbm %s1, %s123
          %s126 = sshll.u32 %s117, 4
          %s127 = int_to_ptr.vmem [resolvable:$true] %s126
          %s128 = sshll.u32 %s124, 4
          %s129 = int_to_ptr.hbm [resolvable:$true] %s128
          %131 = dma.vmem_to_hbm [thread:$0]  %s127, 128, %s129, %s114
        $region32: #{tpu_custom_call.1} parent=23 // pred_fallthru
          _
      $region24: #{tpu_custom_call.1} parent=5 // pred_fallthru
        _
      %p132 = scmp.le.s32.totalorder 2, %s11
      // Predicated region
      $region33: #{tpu_custom_call.1} parent=5 // pred_check
        %p133 = pneg %p132
      $region34: #{tpu_custom_call.1} parent=5 // pred_check_branch
        %135 = sbr.rel (%p133) target = $region36
      $region35: #{tpu_custom_call.1} parent=5 // pred_region
        %s136 = ssub.s32 %s11, 2
        // Predicated region
        $region37: #{tpu_custom_call.1} parent=35 // pred_check
          %p137 = pneg %p61
        $region38: #{tpu_custom_call.1} parent=35 // pred_check_branch
          %139 = sbr.rel (%p137) target = $region40
        $region39: #{tpu_custom_call.1} parent=35 // pred_region
          %s140 = sand.u32 %s46, 1
          %s141 = scalar_lea.sflag [#allocation4], %s140
          %s142 = sand.u32 %s46, 1
          %s143 = smul.addr %s142, 8
          %s144 = scalar_lea.vmem [#allocation5], %s143
          %146 = dma.done %s141, 128
        $region40: #{tpu_custom_call.1} parent=35 // pred_fallthru
          _
      $region36: #{tpu_custom_call.1} parent=5 // pred_fallthru
        _
    $region6: #{tpu_custom_call.1} parent=1 // loop_footer
      %s15 = sadd.s32 1, %s11
    $region7: #{tpu_custom_call.1} parent=1 // loop_footer_branch
      %10 = sbr.rel target = $region3
    $region8: #{tpu_custom_call.1} parent=1 // loop_exit
      _
    %147 = vsyncpa [#allocation3], 1
    %s148 = scalar_lea.sflag [#allocation3], 1
    %149 = vsyncpa %s148, 1
    %150 = vsyncpa [#allocation4], 1
    %s151 = scalar_lea.sflag [#allocation4], 1
    %152 = vsyncpa %s151, 1

// kernel: tpu_custom_call.1
$region0: #{tpu_custom_call.1}
  #allocation0 [shape = 'u32[]', space=smem, size = 0x4, offset = 0x4, fixed_abs, tag = 'smem constant byte address 0x4 - core index']
  #allocation1 [shape = 'u32[72,128]{1,0:T(1,128)}', space=vmem, size = 0x9000, scoped, tag = 'internal scratch']
  %s0 = inlined_call_operand.vmem [shape: bf16[320,16], index: 0, kind: input, shape index: {}]
  %s1 = inlined_call_operand.vmem [shape: bf16[16,128], index: 1, kind: input, shape index: {}]
  %s2 = inlined_call_operand.vmem [shape: f32[1,128], index: 2, kind: input, shape index: {}]
  %s3 = inlined_call_operand.vmem [shape: bf16[128,128], index: 3, kind: input, shape index: {}]
  %s4 = inlined_call_operand.vmem [shape: f32[1,128], index: 4, kind: input, shape index: {}]
  %s5 = inlined_call_operand.vmem [shape: bf16[128,128], index: 5, kind: input, shape index: {}]
  %s6 = inlined_call_operand.vmem [shape: f32[1,128], index: 6, kind: input, shape index: {}]
  %s7 = inlined_call_operand.hbm [shape: f32[320,128], index: 7, kind: output, shape index: {}]
  %s8 = sld [smem:[#allocation0]]
  $region61: #{tpu_custom_call.1} parent=0
    _
  %s10 = ssub.s32 1, %s8
  %s11 = scalar_select 0, %s10, %s8
  $region1: #{tpu_custom_call.1} parent=0
    #allocation2 [shape = 'u8[163840]{0}', space=vmem, size = 0x28000, scoped, tag = 'output window, operand 0']
    #allocation3 [shape = 's32[2]{0}', space=sflag, size = 0x8, scoped, tag = 'scoped memory for tpu_custom_call.1']
    %12 = vsyncpa [#allocation3], 0
    %s13 = scalar_lea.sflag [#allocation3], 1
    %14 = vsyncpa %s13, 0
    loop: start=0, step=1, limit=4
    $region2: #{tpu_custom_call.1} parent=1 // loop_pre_header
      _
    $region3: #{tpu_custom_call.1} parent=1 // loop_header
      %s16 = sphi 0, %s20
      %p17 = scmp.ge.s32.totalorder %s16, 4
      %s26 = sphi 0, %s28
      %s29 = sphi 0, %s26
      %s30 = sphi 0, %s29
      %s46 = sphi 0, %s30
      %s50 = sphi 0, %s50
      %s52 = sphi 0, %s50
      %s53 = sphi 0, %s52
      %s67 = sphi 0, %s53
      %s71 = sphi 0, %s71
      %s73 = sphi 0, %s71
      %s74 = sphi 0, %s73
      %s88 = sphi 0, %s74
      %s92 = sphi 0, %s92
      %s94 = sphi 0, %s92
      %s95 = sphi 0, %s94
      %s109 = sphi 0, %s95
      %s113 = sphi 0, %s113
      %s115 = sphi 0, %s113
      %s116 = sphi 0, %s115
      %s130 = sphi 0, %s116
      %s134 = sphi 0, %s134
      %s136 = sphi 0, %s134
      %s137 = sphi 0, %s136
      %s151 = sphi 0, %s137
      %s155 = sphi 0, %s155
      %s157 = sphi 0, %s155
      %s158 = sphi 0, %s157
      %s172 = sphi 0, %s158
      %s178 = sphi 0, %s180
      %s181 = sphi 0, %s178
      %s182 = sphi 0, %s181
      %s198 = sphi 0, %s182
    $region4: #{tpu_custom_call.1} parent=1 // loop_header_branch
      %19 = sbr.rel (%p17) target = $region8
    $region5: #{tpu_custom_call.1} parent=1 // loop_body
      %s21 = ssub.s32 %s16, 1
      %s22 = ssub.s32 %s16, 2
      %s23 = sadd.s32 %s16, 1
      %s24 = ssub.s32 %s16, %s23
      %p25 = scmp.eq.s32.totalorder %s24, 0
      %s27 = sadd.s32 %s26, 1
      %s28 = scalar_select %p25, %s26, %s27
      %p31 = pneg %p25
      %p32 = scmp.eq.s32.totalorder %s16, 1
      %p33 = por %p31, %p32
      %p34 = scmp.ne.s32.totalorder %s26, %s29
      %p35 = scmp.eq.s32.totalorder %s16, 0
      %p36 = por %p34, %p35
      %p37 = scmp.ne.s32.totalorder %s26, %s29
      %p38 = scmp.eq.s32.totalorder %s21, 1
      %p39 = por %p37, %p38
      %p40 = scmp.ne.s32.totalorder %s29, %s30
      %p41 = scmp.eq.s32.totalorder %s21, 0
      %p42 = por %p40, %p41
      %p43 = scmp.ne.s32.totalorder %s29, %s30
      %p44 = scmp.eq.s32.totalorder %s22, 1
      %p45 = por %p43, %p44
      %p47 = scmp.ne.s32.totalorder %s30, %s46
      %p48 = scmp.eq.s32.totalorder %s22, 0
      %p49 = por %p47, %p48
      %s51 = sadd.s32 %s50, 1
      %p54 = scmp.eq.s32.totalorder %s16, 1
      %p55 = scmp.ne.s32.totalorder %s50, %s52
      %p56 = scmp.eq.s32.totalorder %s16, 0
      %p57 = por %p55, %p56
      %p58 = scmp.ne.s32.totalorder %s50, %s52
      %p59 = scmp.eq.s32.totalorder %s21, 1
      %p60 = por %p58, %p59
      %p61 = scmp.ne.s32.totalorder %s52, %s53
      %p62 = scmp.eq.s32.totalorder %s21, 0
      %p63 = por %p61, %p62
      %p64 = scmp.ne.s32.totalorder %s52, %s53
      %p65 = scmp.eq.s32.totalorder %s22, 1
      %p66 = por %p64, %p65
      %p68 = scmp.ne.s32.totalorder %s53, %s67
      %p69 = scmp.eq.s32.totalorder %s22, 0
      %p70 = por %p68, %p69
      %s72 = sadd.s32 %s71, 1
      %p75 = scmp.eq.s32.totalorder %s16, 1
      %p76 = scmp.ne.s32.totalorder %s71, %s73
      %p77 = scmp.eq.s32.totalorder %s16, 0
      %p78 = por %p76, %p77
      %p79 = scmp.ne.s32.totalorder %s71, %s73
      %p80 = scmp.eq.s32.totalorder %s21, 1
      %p81 = por %p79, %p80
      %p82 = scmp.ne.s32.totalorder %s73, %s74
      %p83 = scmp.eq.s32.totalorder %s21, 0
      %p84 = por %p82, %p83
      %p85 = scmp.ne.s32.totalorder %s73, %s74
      %p86 = scmp.eq.s32.totalorder %s22, 1
      %p87 = por %p85, %p86
      %p89 = scmp.ne.s32.totalorder %s74, %s88
      %p90 = scmp.eq.s32.totalorder %s22, 0
      %p91 = por %p89, %p90
      %s93 = sadd.s32 %s92, 1
      %p96 = scmp.eq.s32.totalorder %s16, 1
      %p97 = scmp.ne.s32.totalorder %s92, %s94
      %p98 = scmp.eq.s32.totalorder %s16, 0
      %p99 = por %p97, %p98
      %p100 = scmp.ne.s32.totalorder %s92, %s94
      %p101 = scmp.eq.s32.totalorder %s21, 1
      %p102 = por %p100, %p101
      %p103 = scmp.ne.s32.totalorder %s94, %s95
      %p104 = scmp.eq.s32.totalorder %s21, 0
      %p105 = por %p103, %p104
      %p106 = scmp.ne.s32.totalorder %s94, %s95
      %p107 = scmp.eq.s32.totalorder %s22, 1
      %p108 = por %p106, %p107
      %p110 = scmp.ne.s32.totalorder %s95, %s109
      %p111 = scmp.eq.s32.totalorder %s22, 0
      %p112 = por %p110, %p111
      %s114 = sadd.s32 %s113, 1
      %p117 = scmp.eq.s32.totalorder %s16, 1
      %p118 = scmp.ne.s32.totalorder %s113, %s115
      %p119 = scmp.eq.s32.totalorder %s16, 0
      %p120 = por %p118, %p119
      %p121 = scmp.ne.s32.totalorder %s113, %s115
      %p122 = scmp.eq.s32.totalorder %s21, 1
      %p123 = por %p121, %p122
      %p124 = scmp.ne.s32.totalorder %s115, %s116
      %p125 = scmp.eq.s32.totalorder %s21, 0
      %p126 = por %p124, %p125
      %p127 = scmp.ne.s32.totalorder %s115, %s116
      %p128 = scmp.eq.s32.totalorder %s22, 1
      %p129 = por %p127, %p128
      %p131 = scmp.ne.s32.totalorder %s116, %s130
      %p132 = scmp.eq.s32.totalorder %s22, 0
      %p133 = por %p131, %p132
      %s135 = sadd.s32 %s134, 1
      %p138 = scmp.eq.s32.totalorder %s16, 1
      %p139 = scmp.ne.s32.totalorder %s134, %s136
      %p140 = scmp.eq.s32.totalorder %s16, 0
      %p141 = por %p139, %p140
      %p142 = scmp.ne.s32.totalorder %s134, %s136
      %p143 = scmp.eq.s32.totalorder %s21, 1
      %p144 = por %p142, %p143
      %p145 = scmp.ne.s32.totalorder %s136, %s137
      %p146 = scmp.eq.s32.totalorder %s21, 0
      %p147 = por %p145, %p146
      %p148 = scmp.ne.s32.totalorder %s136, %s137
      %p149 = scmp.eq.s32.totalorder %s22, 1
      %p150 = por %p148, %p149
      %p152 = scmp.ne.s32.totalorder %s137, %s151
      %p153 = scmp.eq.s32.totalorder %s22, 0
      %p154 = por %p152, %p153
      %s156 = sadd.s32 %s155, 1
      %p159 = scmp.eq.s32.totalorder %s16, 1
      %p160 = scmp.ne.s32.totalorder %s155, %s157
      %p161 = scmp.eq.s32.totalorder %s16, 0
      %p162 = por %p160, %p161
      %p163 = scmp.ne.s32.totalorder %s155, %s157
      %p164 = scmp.eq.s32.totalorder %s21, 1
      %p165 = por %p163, %p164
      %p166 = scmp.ne.s32.totalorder %s157, %s158
      %p167 = scmp.eq.s32.totalorder %s21, 0
      %p168 = por %p166, %p167
      %p169 = scmp.ne.s32.totalorder %s157, %s158
      %p170 = scmp.eq.s32.totalorder %s22, 1
      %p171 = por %p169, %p170
      %p173 = scmp.ne.s32.totalorder %s158, %s172
      %p174 = scmp.eq.s32.totalorder %s22, 0
      %p175 = por %p173, %p174
      %s176 = ssub.s32 %s16, %s23
      %p177 = scmp.eq.s32.totalorder %s176, 0
      %s179 = sadd.s32 %s178, 1
      %s180 = scalar_select %p177, %s178, %s179
      %p183 = pneg %p177
      %p184 = scmp.eq.s32.totalorder %s16, 1
      %p185 = por %p183, %p184
      %p186 = scmp.ne.s32.totalorder %s178, %s181
      %p187 = scmp.eq.s32.totalorder %s16, 0
      %p188 = por %p186, %p187
      %p189 = scmp.ne.s32.totalorder %s178, %s181
      %p190 = scmp.eq.s32.totalorder %s21, 1
      %p191 = por %p189, %p190
      %p192 = scmp.ne.s32.totalorder %s181, %s182
      %p193 = scmp.eq.s32.totalorder %s21, 0
      %p194 = por %p192, %p193
      %p195 = scmp.ne.s32.totalorder %s181, %s182
      %p196 = scmp.eq.s32.totalorder %s22, 1
      %p197 = por %p195, %p196
      %p199 = scmp.ne.s32.totalorder %s182, %s198
      %p200 = scmp.eq.s32.totalorder %s22, 0
      %p201 = por %p199, %p200
      %p202 = scmp.le.s32.totalorder 1, %s16
      %p203 = scmp.lt.s32.totalorder %s16, 3
      %p204 = pnand %p202, %p203
      %p205 = pneg %p204
      // Predicated region
      $region9: #{tpu_custom_call.1} parent=5 // pred_check
        _
      $region10: #{tpu_custom_call.1} parent=5 // pred_check_branch
        %207 = sbr.rel (%p204) target = $region12
      $region11: #{tpu_custom_call.1} parent=5 // pred_region
        %s208 = ssub.s32 %s16, 1
        // Predicated region
        $region13: #{tpu_custom_call.1} parent=11 // pred_check
          %p209 = pneg %p63
        $region14: #{tpu_custom_call.1} parent=11 // pred_check_branch
          %211 = sbr.rel (%p209) target = $region16
        $region15: #{tpu_custom_call.1} parent=11 // pred_region
          _
        $region16: #{tpu_custom_call.1} parent=11 // pred_fallthru
          _
        // Predicated region
        $region17: #{tpu_custom_call.1} parent=11 // pred_check
          %p212 = pneg %p84
        $region18: #{tpu_custom_call.1} parent=11 // pred_check_branch
          %214 = sbr.rel (%p212) target = $region20
        $region19: #{tpu_custom_call.1} parent=11 // pred_region
          _
        $region20: #{tpu_custom_call.1} parent=11 // pred_fallthru
          _
        // Predicated region
        $region21: #{tpu_custom_call.1} parent=11 // pred_check
          %p215 = pneg %p105
        $region22: #{tpu_custom_call.1} parent=11 // pred_check_branch
          %217 = sbr.rel (%p215) target = $region24
        $region23: #{tpu_custom_call.1} parent=11 // pred_region
          _
        $region24: #{tpu_custom_call.1} parent=11 // pred_fallthru
          _
        // Predicated region
        $region25: #{tpu_custom_call.1} parent=11 // pred_check
          %p218 = pneg %p126
        $region26: #{tpu_custom_call.1} parent=11 // pred_check_branch
          %220 = sbr.rel (%p218) target = $region28
        $region27: #{tpu_custom_call.1} parent=11 // pred_region
          _
        $region28: #{tpu_custom_call.1} parent=11 // pred_fallthru
          _
        // Predicated region
        $region29: #{tpu_custom_call.1} parent=11 // pred_check
          %p221 = pneg %p147
        $region30: #{tpu_custom_call.1} parent=11 // pred_check_branch
          %223 = sbr.rel (%p221) target = $region32
        $region31: #{tpu_custom_call.1} parent=11 // pred_region
          _
        $region32: #{tpu_custom_call.1} parent=11 // pred_fallthru
          _
        // Predicated region
        $region33: #{tpu_custom_call.1} parent=11 // pred_check
          %p224 = pneg %p168
        $region34: #{tpu_custom_call.1} parent=11 // pred_check_branch
          %226 = sbr.rel (%p224) target = $region36
        $region35: #{tpu_custom_call.1} parent=11 // pred_region
          _
        $region36: #{tpu_custom_call.1} parent=11 // pred_fallthru
          _
      $region12: #{tpu_custom_call.1} parent=5 // pred_fallthru
        _
      %p227 = scmp.lt.s32.totalorder %s16, 2
      // Predicated region
      $region37: #{tpu_custom_call.1} parent=5 // pred_check
        %p228 = pneg %p227
      $region38: #{tpu_custom_call.1} parent=5 // pred_check_branch
        %230 = sbr.rel (%p228) target = $region40
      $region39: #{tpu_custom_call.1} parent=5 // pred_region
        // Predicated region
        $region41: #{tpu_custom_call.1} parent=39 // pred_check
          %p231 = pneg %p36
        $region42: #{tpu_custom_call.1} parent=39 // pred_check_branch
          %233 = sbr.rel (%p231) target = $region44
        $region43: #{tpu_custom_call.1} parent=39 // pred_region
          %s234 = smul.u32 20, %s16
          %p235 = scmp.lt.s32.totalorder %s234, 39
          %s236 = scalar_select %p235, %s234, 39
          %s237 = smul.addr %s236, 4
          %s238 = scalar_lea.vmem %s0, %s237
          %s239 = smul.u32 20, %s16
        $region44: #{tpu_custom_call.1} parent=39 // pred_fallthru
          _
      $region40: #{tpu_custom_call.1} parent=5 // pred_fallthru
        _
      %p240 = scmp.le.s32.totalorder 1, %s16
      %p241 = scmp.lt.s32.totalorder %s16, 3
      %p242 = pnand %p240, %p241
      %p243 = pneg %p242
      // Predicated region
      $region45: #{tpu_custom_call.1} parent=5 // pred_check
        _
      $region46: #{tpu_custom_call.1} parent=5 // pred_check_branch
        %245 = sbr.rel (%p242) target = $region48
      $region47: #{tpu_custom_call.1} parent=5 // pred_region
        %s246 = ssub.s32 %s16, 1
        %s247 = smul.u32 20, %s21
        %p248 = scmp.lt.s32.totalorder %s247, 39
        %s249 = scalar_select %p248, %s247, 39
        %s250 = smul.addr %s249, 4
        %s251 = scalar_lea.vmem %s0, %s250
        %p252 = pneg %p42
        %p253 = pneg %p39
        %p254 = pneg %p63
        %p255 = pneg %p60
        %p256 = pneg %p84
        %p257 = pneg %p81
        %p258 = pneg %p105
        %p259 = pneg %p102
        %p260 = pneg %p126
        %p261 = pneg %p123
        %p262 = pneg %p147
        %p263 = pneg %p144
        %p264 = pneg %p168
        %p265 = pneg %p165
        %p266 = pneg %p194
        %p267 = pneg %p191
        %s268 = sand.u32 %s181, 1
        %s269 = scalar_lea.sflag [#allocation3], %s268
        %s270 = sand.u32 %s181, 1
        %s271 = smul.addr %s270, 160
        %s272 = scalar_lea.vmem [#allocation2], %s271
        %s273 = smul.u32 20, %s21
        %p274 = scmp.lt.s32.totalorder %s273, 39
        %s275 = scalar_select %p274, %s273, 39
        %s276 = smul.addr %s275, 4
        %s277 = scalar_lea.vmem %s0, %s276
        %s278 = smul.u32 20, %s21
        %s279 = smul.u32 20, %s21
        %v281 = vld [vmem:[%s277] sm:$0xf]
        %v282 = vld [vmem:[%s277 + $0x4] sm:$0xf]
        %v283 = vld [vmem:[%s277 + $0x8] sm:$0xf]
        %v284 = vld [vmem:[%s277 + $0xc] sm:$0xf]
        %v285 = vld [vmem:[%s277 + $0x10] sm:$0xf]
        %v286 = vld [vmem:[%s277 + $0x14] sm:$0xf]
        %v287 = vld [vmem:[%s277 + $0x18] sm:$0xf]
        %v288 = vld [vmem:[%s277 + $0x1c] sm:$0xf]
        %v289 = vld [vmem:[%s277 + $0x20] sm:$0xf]
        %v290 = vld [vmem:[%s277 + $0x24] sm:$0xf]
        %v291 = vld [vmem:[%s277 + $0x28] sm:$0xf]
        %v292 = vld [vmem:[%s277 + $0x2c] sm:$0xf]
        %v293 = vld [vmem:[%s277 + $0x30] sm:$0xf]
        %v294 = vld [vmem:[%s277 + $0x34] sm:$0xf]
        %v295 = vld [vmem:[%s277 + $0x38] sm:$0xf]
        %v296 = vld [vmem:[%s277 + $0x3c] sm:$0xf]
        %v297 = vld [vmem:[%s277 + $0x40] sm:$0xf]
        %v298 = vld [vmem:[%s277 + $0x44] sm:$0xf]
        %v299 = vld [vmem:[%s277 + $0x48] sm:$0xf]
        %v300 = vld [vmem:[%s277 + $0x4c] sm:$0xf]
        %v301 = vld [vmem:[%s1] sm:$0xf]
        %v302 = vld [vmem:[%s1 + $0x4] sm:$0xf]
        %v303 = vld [vmem:[%s2] sm:$0x1]
        %v305 = vperm.slane %v303, 0
        %v327 = vunpack.c.l.b16 %v281
        %v328 = vunpack.c.l.b16 %v282
        %v329 = vunpack.c.l.b16 %v283
        %v330 = vunpack.c.l.b16 %v284
        %v331 = vunpack.c.l.b16 %v285
        %v332 = vunpack.c.l.b16 %v286
        %v333 = vunpack.c.l.b16 %v287
        %v334 = vunpack.c.l.b16 %v288
        %v335 = vunpack.c.l.b16 %v289
        %v336 = vunpack.c.l.b16 %v290
        %v337 = vunpack.c.l.b16 %v291
        %v338 = vunpack.c.l.b16 %v292
        %v339 = vunpack.c.l.b16 %v293
        %v340 = vunpack.c.l.b16 %v294
        %v341 = vunpack.c.l.b16 %v295
        %v342 = vunpack.c.l.b16 %v296
        %v343 = vunpack.c.l.b16 %v297
        %v344 = vunpack.c.l.b16 %v298
        %v345 = vunpack.c.l.b16 %v299
        %v346 = vunpack.c.l.b16 %v300
        %v347 = vpack.c.b16 %v328, %v327
        %v348 = vpack.c.b16 %v330, %v329
        %v349 = vpack.c.b16 %v332, %v331
        %v350 = vpack.c.b16 %v334, %v333
        %v351 = vpack.c.b16 %v336, %v335
        %v352 = vpack.c.b16 %v338, %v337
        %v353 = vpack.c.b16 %v340, %v339
        %v354 = vpack.c.b16 %v342, %v341
        %v355 = vpack.c.b16 %v344, %v343
        %v356 = vpack.c.b16 %v346, %v345
        %v359 = vunpack.c.l.b16 %v301
        %v360 = vunpack.c.l.b16 %v302
        %v361 = vpack.c.b16 %v360, %v359
        %vm363 = vcmask 130048
        %v365 = vsel %vm363, %v347, 0
        %v368 = vsel %vm363, %v348, 0
        %v371 = vsel %vm363, %v349, 0
        %v374 = vsel %vm363, %v350, 0
        %v377 = vsel %vm363, %v351, 0
        %v380 = vsel %vm363, %v352, 0
        %v383 = vsel %vm363, %v353, 0
        %v386 = vsel %vm363, %v354, 0
        %v389 = vsel %vm363, %v355, 0
        %v392 = vsel %vm363, %v356, 0
        %394 = vmatpush.bf16.msra.mxu0 0
        %395 = vmatpush.bf16.msra.mxu0 0
        %396 = vmatpush.bf16.msra.mxu0 0
        %397 = vmatpush.bf16.msra.mxu0 0
        %398 = vmatpush.bf16.msra.mxu0 0
        %399 = vmatpush.bf16.msra.mxu0 0
        %400 = vmatpush.bf16.msra.mxu0 0
        %401 = vmatpush.bf16.msra.mxu0 %v361
        %402 = vmatmul.bf16.gmra.mxu0 %v365
        %v403 = vpop.f32.mrf.mxu0
        %v404 = vadd.f32 %v305, %v403
        %v405 = vpop.f32.mrf.mxu0
        %v406 = vadd.f32 %v305, %v405
        %407 = vmatmul.bf16.gmra.mxu0 %v368
        %v408 = vpop.f32.mrf.mxu0
        %v409 = vadd.f32 %v305, %v408
        %v410 = vpop.f32.mrf.mxu0
        %v411 = vadd.f32 %v305, %v410
        %412 = vmatmul.bf16.gmra.mxu0 %v371
        %v413 = vpop.f32.mrf.mxu0
        %v414 = vadd.f32 %v305, %v413
        %v415 = vpop.f32.mrf.mxu0
        %v416 = vadd.f32 %v305, %v415
        %417 = vmatmul.bf16.gmra.mxu0 %v374
        %v418 = vpop.f32.mrf.mxu0
        %v419 = vadd.f32 %v305, %v418
        %v420 = vpop.f32.mrf.mxu0
        %v421 = vadd.f32 %v305, %v420
        %422 = vmatmul.bf16.gmra.mxu0 %v377
        %v423 = vpop.f32.mrf.mxu0
        %v424 = vadd.f32 %v305, %v423
        %v425 = vpop.f32.mrf.mxu0
        %v426 = vadd.f32 %v305, %v425
        %427 = vmatmul.bf16.gmra.mxu0 %v380
        %v428 = vpop.f32.mrf.mxu0
        %v429 = vadd.f32 %v305, %v428
        %v430 = vpop.f32.mrf.mxu0
        %v431 = vadd.f32 %v305, %v430
        %432 = vmatmul.bf16.gmra.mxu0 %v383
        %v433 = vpop.f32.mrf.mxu0
        %v434 = vadd.f32 %v305, %v433
        %v435 = vpop.f32.mrf.mxu0
        %v436 = vadd.f32 %v305, %v435
        %437 = vmatmul.bf16.gmra.mxu0 %v386
        %v438 = vpop.f32.mrf.mxu0
        %v439 = vadd.f32 %v305, %v438
        %v440 = vpop.f32.mrf.mxu0
        %v441 = vadd.f32 %v305, %v440
        %442 = vmatmul.bf16.gmra.mxu0 %v389
        %v443 = vpop.f32.mrf.mxu0
        %v444 = vadd.f32 %v305, %v443
        %v445 = vpop.f32.mrf.mxu0
        %v446 = vadd.f32 %v305, %v445
        %447 = vmatmul.bf16.gmra.mxu0 %v392
        %v448 = vpop.f32.mrf.mxu0
        %v449 = vadd.f32 %v305, %v448
        %v450 = vpop.f32.mrf.mxu0
        %v451 = vadd.f32 %v305, %v450
        %452 = vdwg.mxu0
        %v453 = vmax.f32 %v404, 0.0
        %v454 = vmax.f32 %v406, 0.0
        %v455 = vmax.f32 %v409, 0.0
        %v456 = vmax.f32 %v411, 0.0
        %v457 = vmax.f32 %v414, 0.0
        %v458 = vmax.f32 %v416, 0.0
        %v459 = vmax.f32 %v419, 0.0
        %v460 = vmax.f32 %v421, 0.0
        %v461 = vmax.f32 %v424, 0.0
        %v462 = vmax.f32 %v426, 0.0
        %v463 = vmax.f32 %v429, 0.0
        %v464 = vmax.f32 %v431, 0.0
        %v465 = vmax.f32 %v434, 0.0
        %v466 = vmax.f32 %v436, 0.0
        %v467 = vmax.f32 %v439, 0.0
        %v468 = vmax.f32 %v441, 0.0
        %v469 = vmax.f32 %v444, 0.0
        %v470 = vmax.f32 %v446, 0.0
        %v471 = vmax.f32 %v449, 0.0
        %v472 = vmax.f32 %v451, 0.0
        %v473 = vpack.c.bf16 %v454, %v453
        %v474 = vpack.c.bf16 %v456, %v455
        %v475 = vpack.c.bf16 %v458, %v457
        %v476 = vpack.c.bf16 %v460, %v459
        %v477 = vpack.c.bf16 %v462, %v461
        %v478 = vpack.c.bf16 %v464, %v463
        %v479 = vpack.c.bf16 %v466, %v465
        %v480 = vpack.c.bf16 %v468, %v467
        %v481 = vpack.c.bf16 %v470, %v469
        %v482 = vpack.c.bf16 %v472, %v471
        %v483 = vld [vmem:[%s3] sm:$0xf]
        %v484 = vld [vmem:[%s3 + $0x4] sm:$0xf]
        %v485 = vld [vmem:[%s3 + $0x8] sm:$0xf]
        %v486 = vld [vmem:[%s3 + $0xc] sm:$0xf]
        %v487 = vld [vmem:[%s3 + $0x10] sm:$0xf]
        %v488 = vld [vmem:[%s3 + $0x14] sm:$0xf]
        %v489 = vld [vmem:[%s3 + $0x18] sm:$0xf]
        %v490 = vld [vmem:[%s3 + $0x1c] sm:$0xf]
        %v491 = vld [vmem:[%s3 + $0x20] sm:$0xf]
        %v492 = vld [vmem:[%s3 + $0x24] sm:$0xf]
        %v493 = vld [vmem:[%s3 + $0x28] sm:$0xf]
        %v494 = vld [vmem:[%s3 + $0x2c] sm:$0xf]
        %v495 = vld [vmem:[%s3 + $0x30] sm:$0xf]
        %v496 = vld [vmem:[%s3 + $0x34] sm:$0xf]
        %v497 = vld [vmem:[%s3 + $0x38] sm:$0xf]
        %v498 = vld [vmem:[%s3 + $0x3c] sm:$0xf]
        %v499 = vld [vmem:[%s4] sm:$0x1]
        %v501 = vperm.slane %v499, 0
        %v519 = vunpack.c.l.b16 %v483
        %v520 = vunpack.c.l.b16 %v484
        %v521 = vunpack.c.l.b16 %v485
        %v522 = vunpack.c.l.b16 %v486
        %v523 = vunpack.c.l.b16 %v487
        %v524 = vunpack.c.l.b16 %v488
        %v525 = vunpack.c.l.b16 %v489
        %v526 = vunpack.c.l.b16 %v490
        %v527 = vunpack.c.l.b16 %v491
        %v528 = vunpack.c.l.b16 %v492
        %v529 = vunpack.c.l.b16 %v493
        %v530 = vunpack.c.l.b16 %v494
        %v531 = vunpack.c.l.b16 %v495
        %v532 = vunpack.c.l.b16 %v496
        %v533 = vunpack.c.l.b16 %v497
        %v534 = vunpack.c.l.b16 %v498
        %v535 = vpack.c.b16 %v520, %v519
        %v536 = vpack.c.b16 %v522, %v521
        %v537 = vpack.c.b16 %v524, %v523
        %v538 = vpack.c.b16 %v526, %v525
        %v539 = vpack.c.b16 %v528, %v527
        %v540 = vpack.c.b16 %v530, %v529
        %v541 = vpack.c.b16 %v532, %v531
        %v542 = vpack.c.b16 %v534, %v533
        %551 = vmatpush.bf16.msra.mxu0 %v542
        %552 = vmatpush.bf16.msra.mxu0 %v541
        %553 = vmatpush.bf16.msra.mxu0 %v540
        %554 = vmatpush.bf16.msra.mxu0 %v539
        %555 = vmatpush.bf16.msra.mxu0 %v538
        %556 = vmatpush.bf16.msra.mxu0 %v537
        %557 = vmatpush.bf16.msra.mxu0 %v536
        %558 = vmatpush.bf16.msra.mxu0 %v535
        %559 = vmatmul.bf16.gmra.mxu0 %v473
        %v560 = vpop.f32.mrf.mxu0
        %v561 = vadd.f32 %v501, %v560
        %v562 = vpop.f32.mrf.mxu0
        %v563 = vadd.f32 %v501, %v562
        %564 = vmatmul.bf16.gmra.mxu0 %v474
        %v565 = vpop.f32.mrf.mxu0
        %v566 = vadd.f32 %v501, %v565
        %v567 = vpop.f32.mrf.mxu0
        %v568 = vadd.f32 %v501, %v567
        %569 = vmatmul.bf16.gmra.mxu0 %v475
        %v570 = vpop.f32.mrf.mxu0
        %v571 = vadd.f32 %v501, %v570
        %v572 = vpop.f32.mrf.mxu0
        %v573 = vadd.f32 %v501, %v572
        %574 = vmatmul.bf16.gmra.mxu0 %v476
        %v575 = vpop.f32.mrf.mxu0
        %v576 = vadd.f32 %v501, %v575
        %v577 = vpop.f32.mrf.mxu0
        %v578 = vadd.f32 %v501, %v577
        %579 = vmatmul.bf16.gmra.mxu0 %v477
        %v580 = vpop.f32.mrf.mxu0
        %v581 = vadd.f32 %v501, %v580
        %v582 = vpop.f32.mrf.mxu0
        %v583 = vadd.f32 %v501, %v582
        %584 = vmatmul.bf16.gmra.mxu0 %v478
        %v585 = vpop.f32.mrf.mxu0
        %v586 = vadd.f32 %v501, %v585
        %v587 = vpop.f32.mrf.mxu0
        %v588 = vadd.f32 %v501, %v587
        %589 = vmatmul.bf16.gmra.mxu0 %v479
        %v590 = vpop.f32.mrf.mxu0
        %v591 = vadd.f32 %v501, %v590
        %v592 = vpop.f32.mrf.mxu0
        %v593 = vadd.f32 %v501, %v592
        %594 = vmatmul.bf16.gmra.mxu0 %v480
        %v595 = vpop.f32.mrf.mxu0
        %v596 = vadd.f32 %v501, %v595
        %v597 = vpop.f32.mrf.mxu0
        %v598 = vadd.f32 %v501, %v597
        %599 = vmatmul.bf16.gmra.mxu0 %v481
        %v600 = vpop.f32.mrf.mxu0
        %v601 = vadd.f32 %v501, %v600
        %v602 = vpop.f32.mrf.mxu0
        %v603 = vadd.f32 %v501, %v602
        %604 = vmatmul.bf16.gmra.mxu0 %v482
        %v605 = vpop.f32.mrf.mxu0
        %v606 = vadd.f32 %v501, %v605
        %v607 = vpop.f32.mrf.mxu0
        %v608 = vadd.f32 %v501, %v607
        %609 = vdwg.mxu0
        %v610 = vtanh.pop %v561
        %v611 = vtanh.pop %v563
        %v612 = vtanh.pop %v566
        %v613 = vtanh.pop %v568
        %v614 = vtanh.pop %v571
        %v615 = vtanh.pop %v573
        %v616 = vtanh.pop %v576
        %v617 = vtanh.pop %v578
        %v618 = vtanh.pop %v581
        %v619 = vtanh.pop %v583
        %v620 = vtanh.pop %v586
        %v621 = vtanh.pop %v588
        %v622 = vtanh.pop %v591
        %v623 = vtanh.pop %v593
        %v624 = vtanh.pop %v596
        %v625 = vtanh.pop %v598
        %v626 = vtanh.pop %v601
        %v627 = vtanh.pop %v603
        %v628 = vtanh.pop %v606
        %v629 = vtanh.pop %v608
        %v630 = vpack.c.bf16 %v611, %v610
        %v631 = vpack.c.bf16 %v613, %v612
        %v632 = vpack.c.bf16 %v615, %v614
        %v633 = vpack.c.bf16 %v617, %v616
        %v634 = vpack.c.bf16 %v619, %v618
        %v635 = vpack.c.bf16 %v621, %v620
        %v636 = vpack.c.bf16 %v623, %v622
        %v637 = vpack.c.bf16 %v625, %v624
        %v638 = vpack.c.bf16 %v627, %v626
        %v639 = vpack.c.bf16 %v629, %v628
        %v640 = vld [vmem:[%s5] sm:$0xf]
        %v641 = vld [vmem:[%s5 + $0x4] sm:$0xf]
        %v642 = vld [vmem:[%s5 + $0x8] sm:$0xf]
        %v643 = vld [vmem:[%s5 + $0xc] sm:$0xf]
        %v644 = vld [vmem:[%s5 + $0x10] sm:$0xf]
        %v645 = vld [vmem:[%s5 + $0x14] sm:$0xf]
        %v646 = vld [vmem:[%s5 + $0x18] sm:$0xf]
        %v647 = vld [vmem:[%s5 + $0x1c] sm:$0xf]
        %v648 = vld [vmem:[%s5 + $0x20] sm:$0xf]
        %v649 = vld [vmem:[%s5 + $0x24] sm:$0xf]
        %v650 = vld [vmem:[%s5 + $0x28] sm:$0xf]
        %v651 = vld [vmem:[%s5 + $0x2c] sm:$0xf]
        %v652 = vld [vmem:[%s5 + $0x30] sm:$0xf]
        %v653 = vld [vmem:[%s5 + $0x34] sm:$0xf]
        %v654 = vld [vmem:[%s5 + $0x38] sm:$0xf]
        %v655 = vld [vmem:[%s5 + $0x3c] sm:$0xf]
        %v656 = vld [vmem:[%s6] sm:$0x1]
        %v658 = vperm.slane %v656, 0
        %v676 = vunpack.c.l.b16 %v640
        %v677 = vunpack.c.l.b16 %v641
        %v678 = vunpack.c.l.b16 %v642
        %v679 = vunpack.c.l.b16 %v643
        %v680 = vunpack.c.l.b16 %v644
        %v681 = vunpack.c.l.b16 %v645
        %v682 = vunpack.c.l.b16 %v646
        %v683 = vunpack.c.l.b16 %v647
        %v684 = vunpack.c.l.b16 %v648
        %v685 = vunpack.c.l.b16 %v649
        %v686 = vunpack.c.l.b16 %v650
        %v687 = vunpack.c.l.b16 %v651
        %v688 = vunpack.c.l.b16 %v652
        %v689 = vunpack.c.l.b16 %v653
        %v690 = vunpack.c.l.b16 %v654
        %v691 = vunpack.c.l.b16 %v655
        %v692 = vpack.c.b16 %v677, %v676
        %v693 = vpack.c.b16 %v679, %v678
        %v694 = vpack.c.b16 %v681, %v680
        %v695 = vpack.c.b16 %v683, %v682
        %v696 = vpack.c.b16 %v685, %v684
        %v697 = vpack.c.b16 %v687, %v686
        %v698 = vpack.c.b16 %v689, %v688
        %v699 = vpack.c.b16 %v691, %v690
        %708 = vmatpush.bf16.msra.mxu0 %v699
        %709 = vmatpush.bf16.msra.mxu0 %v698
        %710 = vmatpush.bf16.msra.mxu0 %v697
        %711 = vmatpush.bf16.msra.mxu0 %v696
        %712 = vmatpush.bf16.msra.mxu0 %v695
        %713 = vmatpush.bf16.msra.mxu0 %v694
        %714 = vmatpush.bf16.msra.mxu0 %v693
        %715 = vmatpush.bf16.msra.mxu0 %v692
        %716 = vmatmul.bf16.gmra.mxu0 %v630
        %v717 = vpop.f32.mrf.mxu0
        %v718 = vadd.f32 %v658, %v717
        %v719 = vpop.f32.mrf.mxu0
        %v720 = vadd.f32 %v658, %v719
        %721 = vmatmul.bf16.gmra.mxu0 %v631
        %v722 = vpop.f32.mrf.mxu0
        %v723 = vadd.f32 %v658, %v722
        %v724 = vpop.f32.mrf.mxu0
        %v725 = vadd.f32 %v658, %v724
        %726 = vmatmul.bf16.gmra.mxu0 %v632
        %v727 = vpop.f32.mrf.mxu0
        %v728 = vadd.f32 %v658, %v727
        %v729 = vpop.f32.mrf.mxu0
        %v730 = vadd.f32 %v658, %v729
        %731 = vmatmul.bf16.gmra.mxu0 %v633
        %v732 = vpop.f32.mrf.mxu0
        %v733 = vadd.f32 %v658, %v732
        %v734 = vpop.f32.mrf.mxu0
        %v735 = vadd.f32 %v658, %v734
        %736 = vmatmul.bf16.gmra.mxu0 %v634
        %v737 = vpop.f32.mrf.mxu0
        %v738 = vadd.f32 %v658, %v737
        %v739 = vpop.f32.mrf.mxu0
        %v740 = vadd.f32 %v658, %v739
        %741 = vmatmul.bf16.gmra.mxu0 %v635
        %v742 = vpop.f32.mrf.mxu0
        %v743 = vadd.f32 %v658, %v742
        %v744 = vpop.f32.mrf.mxu0
        %v745 = vadd.f32 %v658, %v744
        %746 = vmatmul.bf16.gmra.mxu0 %v636
        %v747 = vpop.f32.mrf.mxu0
        %v748 = vadd.f32 %v658, %v747
        %v749 = vpop.f32.mrf.mxu0
        %v750 = vadd.f32 %v658, %v749
        %751 = vmatmul.bf16.gmra.mxu0 %v637
        %v752 = vpop.f32.mrf.mxu0
        %v753 = vadd.f32 %v658, %v752
        %v754 = vpop.f32.mrf.mxu0
        %v755 = vadd.f32 %v658, %v754
        %756 = vmatmul.bf16.gmra.mxu0 %v638
        %v757 = vpop.f32.mrf.mxu0
        %v758 = vadd.f32 %v658, %v757
        %v759 = vpop.f32.mrf.mxu0
        %v760 = vadd.f32 %v658, %v759
        %761 = vmatmul.bf16.gmra.mxu0 %v639
        %v762 = vpop.f32.mrf.mxu0
        %v763 = vadd.f32 %v658, %v762
        %v764 = vpop.f32.mrf.mxu0
        %v765 = vadd.f32 %v658, %v764
        %766 = vdwg.mxu0
        %767 = vst [vmem:[%s272] sm:$0xff] %v718
        %768 = vst [vmem:[%s272 + $0x8] sm:$0xff] %v720
        %769 = vst [vmem:[%s272 + $0x10] sm:$0xff] %v723
        %770 = vst [vmem:[%s272 + $0x18] sm:$0xff] %v725
        %771 = vst [vmem:[%s272 + $0x20] sm:$0xff] %v728
        %772 = vst [vmem:[%s272 + $0x28] sm:$0xff] %v730
        %773 = vst [vmem:[%s272 + $0x30] sm:$0xff] %v733
        %774 = vst [vmem:[%s272 + $0x38] sm:$0xff] %v735
        %775 = vst [vmem:[%s272 + $0x40] sm:$0xff] %v738
        %776 = vst [vmem:[%s272 + $0x48] sm:$0xff] %v740
        %777 = vst [vmem:[%s272 + $0x50] sm:$0xff] %v743
        %778 = vst [vmem:[%s272 + $0x58] sm:$0xff] %v745
        %779 = vst [vmem:[%s272 + $0x60] sm:$0xff] %v748
        %780 = vst [vmem:[%s272 + $0x68] sm:$0xff] %v750
        %781 = vst [vmem:[%s272 + $0x70] sm:$0xff] %v753
        %782 = vst [vmem:[%s272 + $0x78] sm:$0xff] %v755
        %783 = vst [vmem:[%s272 + $0x80] sm:$0xff] %v758
        %784 = vst [vmem:[%s272 + $0x88] sm:$0xff] %v760
        %785 = vst [vmem:[%s272 + $0x90] sm:$0xff] %v763
        %786 = vst [vmem:[%s272 + $0x98] sm:$0xff] %v765
        %s787 = sand.u32 %s181, 1
        %s788 = scalar_lea.sflag [#allocation3], %s787
        %s789 = sand.u32 %s181, 1
        %s790 = smul.addr %s789, 160
        %s791 = scalar_lea.vmem [#allocation2], %s790
        // Predicated region
        $region49: #{tpu_custom_call.1} parent=47 // pred_check
          %p792 = pneg %p191
        $region50: #{tpu_custom_call.1} parent=47 // pred_check_branch
          %794 = sbr.rel (%p792) target = $region52
        $region51: #{tpu_custom_call.1} parent=47 // pred_region
          %s795 = smul.u32 20, %s21
          %797 = vsyncadd %s788, 0
          %s798 = smul.addr %s795, 8
          %s799 = scalar_lea.hbm %s7, %s798
          %s800 = sshll.u32 %s791, 4
          %s801 = int_to_ptr.vmem [resolvable:$true] %s800
          %s802 = sshll.u32 %s799, 4
          %s803 = int_to_ptr.hbm [resolvable:$true] %s802
          %808 = dma.vmem_to_hbm [thread:$0]  %s801, 2560, %s803, %s788, 128, 128, 8
        $region52: #{tpu_custom_call.1} parent=47 // pred_fallthru
          _
      $region48: #{tpu_custom_call.1} parent=5 // pred_fallthru
        _
      %p809 = scmp.le.s32.totalorder 2, %s16
      // Predicated region
      $region53: #{tpu_custom_call.1} parent=5 // pred_check
        %p810 = pneg %p809
      $region54: #{tpu_custom_call.1} parent=5 // pred_check_branch
        %812 = sbr.rel (%p810) target = $region56
      $region55: #{tpu_custom_call.1} parent=5 // pred_region
        %s813 = ssub.s32 %s16, 2
        // Predicated region
        $region57: #{tpu_custom_call.1} parent=55 // pred_check
          %p814 = pneg %p197
        $region58: #{tpu_custom_call.1} parent=55 // pred_check_branch
          %816 = sbr.rel (%p814) target = $region60
        $region59: #{tpu_custom_call.1} parent=55 // pred_region
          %s817 = sand.u32 %s182, 1
          %s818 = scalar_lea.sflag [#allocation3], %s817
          %s819 = sand.u32 %s182, 1
          %s820 = smul.addr %s819, 160
          %s821 = scalar_lea.vmem [#allocation2], %s820
          %823 = dma.done %s818, 2560
        $region60: #{tpu_custom_call.1} parent=55 // pred_fallthru
          _
      $region56: #{tpu_custom_call.1} parent=5 // pred_fallthru
        _
    $region6: #{tpu_custom_call.1} parent=1 // loop_footer
      %s20 = sadd.s32 1, %s16
    $region7: #{tpu_custom_call.1} parent=1 // loop_footer_branch
      %15 = sbr.rel target = $region3
    $region8: #{tpu_custom_call.1} parent=1 // loop_exit
      _
    %824 = vsyncpa [#allocation3], 1
    %s825 = scalar_lea.sflag [#allocation3], 1
    %826 = vsyncpa %s825, 1

</llo_original>
